<compile_context>
chip_gen: v7x
topology: tpu7x:2x2x1
jax: 0.10.0
libtpu: 0.0.40
codegen_flags: <defaults>
</compile_context>

<pallas_src>
import jax
import jax.numpy as jnp
from jax import lax
from jax.experimental import pallas as pl
from jax.experimental.pallas import tpu as pltpu

KH = KW = 3
EPS = 1e-5


# --------------------------------------------------------------------------
# Kernel 1a: masked path — conv(x*mask) + mask conv + per-step BN statistics
# --------------------------------------------------------------------------
def _conv_mask_kernel(x_ref, m_ref, wx_ref, wm_ref, y_ref, mo_ref, st_ref):
    # x_ref  : (1, TH+2, Wp*Cin) bf16  padded input rows, (W,C) flattened on lanes
    # m_ref  : (1, TH+2, Wp*Cin) bf16  padded mask rows
    # wx_ref : (KH, Wp*Cin, W*Cout) bf16  banded conv weights (one per dy)
    # wm_ref : (KH, Wp*Cin, W*Cout) bf16  banded mask-conv weights
    # y_ref  : (1, TH, W*Cout) bf16  pre-BN conv output (lane-dense)
    # mo_ref : (1, TH, W*Cout) bf16  thresholded mask output (lane-dense)
    # st_ref : (1, 2, W*Cout) f32    per-step partial [sum, sum_of_squares]
    th = y_ref.shape[1]
    wc = y_ref.shape[2]

    ms = m_ref[0]                                       # bf16 (TH+2, Wp*Cin)
    # Binary (0/1) mask makes this multiply exact in bf16; do the VPU math in
    # f32 so it also lowers on v5e (no bf16 VPU there).
    xm = (x_ref[0].astype(jnp.float32) * ms.astype(jnp.float32)).astype(jnp.bfloat16)

    # x conv: three banded MXU dots (dx taps folded into the weight band).
    acc = jnp.zeros((th, wc), jnp.float32)
    for dy in range(KH):
        acc = acc + jnp.dot(xm[dy:dy + th, :], wx_ref[dy],
                            preferred_element_type=jnp.float32)
    y_ref[0] = acc.astype(y_ref.dtype)
    st_ref[0] = jnp.concatenate(
        [jnp.sum(acc, axis=0, keepdims=True),
         jnp.sum(acc * acc, axis=0, keepdims=True)], axis=0)

    # Mask conv after the x conv so both f32 accumulators are never live
    # simultaneously (halves peak vreg pressure at larger TH).
    macc = jnp.zeros((th, wc), jnp.float32)
    for dy in range(KH):
        macc = macc + jnp.dot(ms[dy:dy + th, :], wm_ref[dy],
                              preferred_element_type=jnp.float32)
    mo_ref[0] = (macc > 0.0).astype(mo_ref.dtype)


# --------------------------------------------------------------------------
# Kernel 1b: no-mask fast path — conv(x) + per-step BN statistics only
# --------------------------------------------------------------------------
def _conv_nomask_kernel(x_ref, wx_ref, y_ref, st_ref):
    th = y_ref.shape[1]
    wc = y_ref.shape[2]
    xb = x_ref[0]                                        # bf16, no mask multiply
    acc = jnp.zeros((th, wc), jnp.float32)
    for dy in range(KH):
        acc = acc + jnp.dot(xb[dy:dy + th, :], wx_ref[dy],
                            preferred_element_type=jnp.float32)
    y_ref[0] = acc.astype(y_ref.dtype)
    st_ref[0] = jnp.concatenate(
        [jnp.sum(acc, axis=0, keepdims=True),
         jnp.sum(acc * acc, axis=0, keepdims=True)], axis=0)


# --------------------------------------------------------------------------
# Kernel 2: BN affine + ReLU (lane-dense elementwise, fully parallel grid)
# --------------------------------------------------------------------------
def _bn_relu_kernel(y_ref, scale_ref, shift_ref, o_ref):
    y = y_ref[...].astype(jnp.float32)
    o_ref[...] = jnp.maximum(y * scale_ref[...] + shift_ref[...], 0.0)


# --------------------------------------------------------------------------
# Weight preparation: fold (dx, ci) into a banded block-Toeplitz matrix
#   banded[dy, (w+dx)*Cin + ci, w*Cout + co] = w[co, ci, dy, dx]
# --------------------------------------------------------------------------
def _banded_weights(w_oihw, width, width_p):
    cout, cin = w_oihw.shape[0], w_oihw.shape[1]
    wk = jnp.transpose(w_oihw.astype(jnp.float32), (2, 3, 1, 0))  # (KH, KW, Cin, Cout)
    big = jnp.zeros((KH, cin, cout, width_p, width), jnp.float32)
    w_idx = jnp.arange(width)
    for dx in range(KW):
        big = big.at[:, :, :, w_idx + dx, w_idx].add(wk[:, dx][..., None])
    big = jnp.transpose(big, (0, 3, 1, 4, 2))            # (KH, Wp, Cin, W, Cout)
    return big.reshape(KH, width_p * cin, width * cout)


def _pick_row_tile(h, width_p, cin, apply_mask, budget_bytes=8 << 20):
    """Largest divisor of H whose double-buffered bf16 slabs fit the budget."""
    streams = 2 if apply_mask else 1
    for th in range(h, 0, -1):
        if h % th:
            continue
        if streams * 2 * (th + 2) * width_p * cin * 2 <= budget_bytes:
            return th
    return 1


# --------------------------------------------------------------------------
# Wrapper (NCHW in / NCHW out, matching the PyTorch module)
# --------------------------------------------------------------------------
def pconv_forward(x_nchw, w_conv, w_mask, gamma, beta, mask_nchw=None):
    N, Cin, H, W = x_nchw.shape
    Cout = w_conv.shape[0]
    Hp, Wp = H + 2, W + 2
    WC = W * Cout
    apply_mask = mask_nchw is not None

    x_nhwc = jnp.transpose(x_nchw, (0, 2, 3, 1)).astype(jnp.bfloat16)
    pad = ((0, 0), (1, 1), (1, 1), (0, 0))
    xp = jnp.pad(x_nhwc, pad)                            # (N, Hp, Wp, Cin)

    TH = _pick_row_tile(H, Wp, Cin, apply_mask)
    nH = H // TH
    G = N * nH

    def _slabs(a):
        if nH == 1:
            return a.reshape(N, Hp, Wp * Cin)
        s = jnp.stack([a[:, i * TH:i * TH + TH + 2] for i in range(nH)], axis=1)
        return s.reshape(N * nH, TH + 2, Wp * Cin)

    x_slab = _slabs(xp)
    wx_b = _banded_weights(w_conv, W, Wp).astype(jnp.bfloat16)

    # VMEM budget from the actual tile footprint, capped at 32 MiB so it is
    # safe on v7x (64 MiB VMEM per TC) as well as v5e/v6e (128 MiB).
    slab_elems = (TH + 2) * Wp * Cin
    streams = 2 if apply_mask else 1
    w_bytes = KH * Wp * Cin * WC * 2
    tile_bytes = (streams * 2 * slab_elems * 2            # bf16 slabs, 2-deep
                  + streams * w_bytes                     # resident banded weights
                  + streams * 2 * TH * WC * 2             # bf16 outputs, 2-deep
                  + 2 * 2 * WC * 4)                       # per-step stats, 2-deep
    vmem_limit = int(min(32 << 20, max(8 << 20, 4 * tile_bytes)))

    x_spec = pl.BlockSpec((1, TH + 2, Wp * Cin), lambda i: (i, 0, 0))
    w_spec = pl.BlockSpec((KH, Wp * Cin, WC), lambda i: (0, 0, 0))
    y_spec = pl.BlockSpec((1, TH, WC), lambda i: (i, 0, 0))
    st_spec = pl.BlockSpec((1, 2, WC), lambda i: (i, 0, 0))
    cparams = pltpu.CompilerParams(
        dimension_semantics=("parallel",),      # per-step stats -> no carried state
        vmem_limit_bytes=vmem_limit,
    )

    if apply_mask:
        m_nhwc = jnp.transpose(mask_nchw, (0, 2, 3, 1)).astype(jnp.bfloat16)
        m_slab = _slabs(jnp.pad(m_nhwc, pad))
        wm_b = _banded_weights(w_mask, W, Wp).astype(jnp.bfloat16)

        y_conv, m_out, stats = pl.pallas_call(
            _conv_mask_kernel,
            grid=(G,),
            in_specs=[x_spec, x_spec, w_spec, w_spec],
            out_specs=(y_spec, y_spec, st_spec),
            out_shape=(
                jax.ShapeDtypeStruct((G, TH, WC), jnp.bfloat16),
                jax.ShapeDtypeStruct((G, TH, WC), jnp.bfloat16),
                jax.ShapeDtypeStruct((G, 2, WC), jnp.float32),
            ),
            compiler_params=cparams,
        )(x_slab, m_slab, wx_b, wm_b)

        m_final = jnp.transpose(m_out.reshape(N, H, W, Cout).astype(jnp.float32),
                                (0, 3, 1, 2))
    else:
        y_conv, stats = pl.pallas_call(
            _conv_nomask_kernel,
            grid=(G,),
            in_specs=[x_spec, w_spec],
            out_specs=(y_spec, st_spec),
            out_shape=(
                jax.ShapeDtypeStruct((G, TH, WC), jnp.bfloat16),
                jax.ShapeDtypeStruct((G, 2, WC), jnp.float32),
            ),
            compiler_params=cparams,
        )(x_slab, wx_b)

        # mask_conv(all-ones) depends only on the border pattern and channel:
        # compute (macc > 0) analytically in the wrapper (9 adds over (H,W,Cout)).
        wsum = jnp.sum(w_mask.astype(jnp.float32), axis=1)        # (Cout, KH, KW)
        ones_p = jnp.pad(jnp.ones((H, W), jnp.float32), ((1, 1), (1, 1)))
        macc = jnp.zeros((H, W, Cout), jnp.float32)
        for dy in range(KH):
            for dx in range(KW):
                macc = macc + ones_p[dy:dy + H, dx:dx + W, None] * wsum[:, dy, dx]
        m_hw = (macc > 0.0).astype(jnp.float32)                   # (H, W, Cout)
        m_final = jnp.broadcast_to(jnp.transpose(m_hw, (2, 0, 1))[None],
                                   (N, Cout, H, W))

    # BatchNorm2d training-mode statistics (biased variance) from the fused
    # f32 partial sums (one (2, WC) row per grid step).
    cnt = float(N * H * W)
    s = stats.sum(axis=0).reshape(2, W, Cout).sum(axis=1)          # (2, Cout)
    mean = s[0] / cnt
    var = jnp.maximum(s[1] / cnt - mean * mean, 0.0)
    scale = gamma.astype(jnp.float32) * lax.rsqrt(var + EPS)
    shift = beta.astype(jnp.float32) - mean * scale
    # TODO(synk): BatchNorm2d running_mean/running_var buffer updates are not emitted.
    # TODO(synk): E[x^2]-E[x]^2 can cancel for very large activation means;
    #             switch to a two-pass mean-then-variance if precision issues appear.

    # ---- BN + ReLU streaming pass: fold rows into the lane axis for a wide,
    #      unmasked store path. ----
    rows = N * H
    k = 1
    for cand in (32, 16, 8, 4, 2):
        if rows % cand == 0 and cand * WC <= 4096:
            k = cand
            break
    rows2 = rows // k
    WC2 = k * WC

    y2 = y_conv.reshape(rows2, WC2)                                # bf16
    scale_row = jnp.tile(scale, W * k).reshape(1, WC2)
    shift_row = jnp.tile(shift, W * k).reshape(1, WC2)

    bn_budget = 8 << 20
    TR = rows2
    for cand in range(rows2, 0, -1):
        if rows2 % cand:
            continue
        if cand != rows2 and cand % 8 != 0:
            continue
        if 2 * cand * WC2 * (2 + 4) <= bn_budget:                  # bf16 in + f32 out, 2-deep
            TR = cand
            break
    bn_tile_bytes = 2 * TR * WC2 * (2 + 4) + 2 * WC2 * 4
    bn_vmem = int(min(32 << 20, max(8 << 20, 4 * bn_tile_bytes)))

    y_bn = pl.pallas_call(
        _bn_relu_kernel,
        grid=(rows2 // TR,),
        in_specs=[
            pl.BlockSpec((TR, WC2), lambda i: (i, 0)),
            pl.BlockSpec((1, WC2), lambda i: (0, 0)),
            pl.BlockSpec((1, WC2), lambda i: (0, 0)),
        ],
        out_specs=pl.BlockSpec((TR, WC2), lambda i: (i, 0)),
        out_shape=jax.ShapeDtypeStruct((rows2, WC2), jnp.float32),
        compiler_params=pltpu.CompilerParams(
            dimension_semantics=("parallel",),
            vmem_limit_bytes=bn_vmem,
        ),
    )(y2, scale_row, shift_row)

    y_out = jnp.transpose(y_bn.reshape(N, H, W, Cout), (0, 3, 1, 2))
    return y_out, m_final


# --------------------------------------------------------------------------
# Pure-JAX f32 reference matching the PyTorch module semantics (NCHW)
# --------------------------------------------------------------------------
def pconv_reference(x, w_conv, w_mask, gamma, beta, mask=None):
    if mask is None:
        mask = jnp.ones_like(x)
    dn = ('NCHW', 'OIHW', 'NCHW')
    hi = lax.Precision.HIGHEST
    y = lax.conv_general_dilated(x * mask, w_conv, (1, 1), ((1, 1), (1, 1)),
                                 dimension_numbers=dn, precision=hi)
    macc = lax.conv_general_dilated(mask, w_mask, (1, 1), ((1, 1), (1, 1)),
                                    dimension_numbers=dn, precision=hi)
    m = (macc > 0).astype(jnp.float32)
    mean = jnp.mean(y, axis=(0, 2, 3), keepdims=True)
    var = jnp.mean((y - mean) ** 2, axis=(0, 2, 3), keepdims=True)
    y = (y - mean) * lax.rsqrt(var + EPS)
    y = y * gamma.reshape(1, -1, 1, 1) + beta.reshape(1, -1, 1, 1)
    return jnp.maximum(y, 0.0), m, macc


if __name__ == "__main__":
    key = jax.random.PRNGKey(0)
    k_x, k_w, k_wm, k_m, k_g, k_b = jax.random.split(key, 6)

    N, Cin, Cout, H, W = 2, 4, 8, 16, 16

    x = jax.random.normal(k_x, (N, Cin, H, W), jnp.float32)
    w_conv = 0.1 * jax.random.normal(k_w, (Cout, Cin, KH, KW), jnp.float32)
    w_mask = 0.1 * jax.random.normal(k_wm, (Cout, Cin, KH, KW), jnp.float32)
    gamma = 1.0 + 0.1 * jax.random.normal(k_g, (Cout,), jnp.float32)
    beta = 0.1 * jax.random.normal(k_b, (Cout,), jnp.float32)
    bin_mask = (jax.random.uniform(k_m, (N, Cin, H, W)) > 0.3).astype(jnp.float32)

    for m_in in (None, bin_mask):          # no-mask fast path and explicit-mask path
        y, m_o = pconv_forward(x, w_conv, w_mask, gamma, beta, m_in)
        y = jax.block_until_ready(y)
        m_o = jax.block_until_ready(m_o)

        y_ref, m_ref, macc_ref = pconv_reference(x, w_conv, w_mask, gamma, beta, m_in)
        assert y.shape == (N, Cout, H, W) and m_o.shape == (N, Cout, H, W)
        # Conv uses bf16 operands with f32 accumulation and the pre-BN output
        # is stored as bf16 -> compare with a bf16-level tolerance.
        assert jnp.allclose(y, y_ref, atol=8e-2, rtol=5e-2), "y mismatch"
        # Mask must agree everywhere the pre-threshold value is not numerically ~0
        # (the > 0 threshold is ambiguous within rounding of the reduction).
        ambiguous = jnp.abs(macc_ref) < 1e-2
        assert bool(jnp.all((m_o == m_ref) | ambiguous)), "mask mismatch"

    print("KERNEL_OK")
</pallas_src>

<mosaic_0001>
module attributes {stable_mosaic.version = 11 : i64} {
  func.func @_conv_nomask_kernel(%arg0: i32, %arg1: memref<1x18x72xbf16, #tpu.memory_space<vmem>>, %arg2: memref<3x72x128xbf16, #tpu.memory_space<vmem>>, %arg3: memref<1x16x128xbf16, #tpu.memory_space<vmem>>, %arg4: memref<1x2x128xf32, #tpu.memory_space<vmem>>) attributes {dimension_semantics = [#tpu.dimension_semantics<parallel>], iteration_bounds = array<i64: 2>, scalar_prefetch = 0 : i64, scratch_operands = 0 : i64, tpu.core_type = #tpu.core_type<tc>, window_params = [{transform_indices = @transform_0, window_bounds = array<i64: 1, 18, 72>}, {pipeline_mode = #tpu.pipeline_mode<synchronous>, transform_indices = @transform_1, window_bounds = array<i64: 3, 72, 128>}, {transform_indices = @transform_2, window_bounds = array<i64: 1, 16, 128>}, {transform_indices = @transform_3, window_bounds = array<i64: 1, 2, 128>}]} {
    %c0 = arith.constant 0 : index
    %c0_0 = arith.constant 0 : index
    %c0_1 = arith.constant 0 : index
    %0 = vector.load %arg1[%c0, %c0_0, %c0_1] : memref<1x18x72xbf16, #tpu.memory_space<vmem>>, vector<1x18x72xbf16>
    %1 = vector.shape_cast %0 : vector<1x18x72xbf16> to vector<18x72xbf16>
    %cst = arith.constant 0.000000e+00 : f32
    %2 = vector.broadcast %cst : f32 to vector<16x128xf32>
    %3 = vector.extract_strided_slice %1 {offsets = [0, 0], sizes = [16, 72], strides = [1, 1]} : vector<18x72xbf16> to vector<16x72xbf16>
    %c0_2 = arith.constant 0 : index
    %c0_3 = arith.constant 0 : index
    %c0_4 = arith.constant 0 : index
    %4 = vector.load %arg2[%c0_2, %c0_3, %c0_4] : memref<3x72x128xbf16, #tpu.memory_space<vmem>>, vector<1x72x128xbf16>
    %5 = vector.shape_cast %4 : vector<1x72x128xbf16> to vector<72x128xbf16>
    %cst_5 = arith.constant dense<0.000000e+00> : vector<16x128xf32>
    %6 = tpu.matmul %3, %5, %cst_5 {dimension_numbers = #tpu.dot_dimension_numbers<[1], [0], [0], [1], [0, 0, 1, 1], [], []>} : vector<16x72xbf16>, vector<72x128xbf16>, vector<16x128xf32> -> vector<16x128xf32>
    %7 = arith.addf %2, %6 : vector<16x128xf32>
    %8 = vector.extract_strided_slice %1 {offsets = [1, 0], sizes = [16, 72], strides = [1, 1]} : vector<18x72xbf16> to vector<16x72xbf16>
    %c1 = arith.constant 1 : index
    %c0_6 = arith.constant 0 : index
    %c0_7 = arith.constant 0 : index
    %9 = vector.load %arg2[%c1, %c0_6, %c0_7] : memref<3x72x128xbf16, #tpu.memory_space<vmem>>, vector<1x72x128xbf16>
    %10 = vector.shape_cast %9 : vector<1x72x128xbf16> to vector<72x128xbf16>
    %cst_8 = arith.constant dense<0.000000e+00> : vector<16x128xf32>
    %11 = tpu.matmul %8, %10, %cst_8 {dimension_numbers = #tpu.dot_dimension_numbers<[1], [0], [0], [1], [0, 0, 1, 1], [], []>} : vector<16x72xbf16>, vector<72x128xbf16>, vector<16x128xf32> -> vector<16x128xf32>
    %12 = arith.addf %7, %11 : vector<16x128xf32>
    %13 = vector.extract_strided_slice %1 {offsets = [2, 0], sizes = [16, 72], strides = [1, 1]} : vector<18x72xbf16> to vector<16x72xbf16>
    %c2 = arith.constant 2 : index
    %c0_9 = arith.constant 0 : index
    %c0_10 = arith.constant 0 : index
    %14 = vector.load %arg2[%c2, %c0_9, %c0_10] : memref<3x72x128xbf16, #tpu.memory_space<vmem>>, vector<1x72x128xbf16>
    %15 = vector.shape_cast %14 : vector<1x72x128xbf16> to vector<72x128xbf16>
    %cst_11 = arith.constant dense<0.000000e+00> : vector<16x128xf32>
    %16 = tpu.matmul %13, %15, %cst_11 {dimension_numbers = #tpu.dot_dimension_numbers<[1], [0], [0], [1], [0, 0, 1, 1], [], []>} : vector<16x72xbf16>, vector<72x128xbf16>, vector<16x128xf32> -> vector<16x128xf32>
    %17 = arith.addf %12, %16 : vector<16x128xf32>
    %18 = arith.truncf %17 : vector<16x128xf32> to vector<16x128xbf16>
    %c0_12 = arith.constant 0 : index
    %c0_13 = arith.constant 0 : index
    %c0_14 = arith.constant 0 : index
    %19 = vector.load %arg3[%c0_12, %c0_13, %c0_14] : memref<1x16x128xbf16, #tpu.memory_space<vmem>>, vector<1x16x128xbf16>
    %20 = vector.shape_cast %19 : vector<1x16x128xbf16> to vector<16x128xbf16>
    %21 = vector.shape_cast %18 : vector<16x128xbf16> to vector<1x16x128xbf16>
    tpu.vector_store %arg3[%c0_12, %c0_13, %c0_14], %21 {strides = array<i32>} : memref<1x16x128xbf16, #tpu.memory_space<vmem>>, vector<1x16x128xbf16>,
    %cst_15 = arith.constant dense<0.000000e+00> : vector<128xf32>
    %22 = vector.multi_reduction <add>, %17, %cst_15 [0] : vector<16x128xf32> to vector<128xf32>
    %23 = vector.shape_cast %22 : vector<128xf32> to vector<1x128xf32>
    %24 = arith.mulf %17, %17 : vector<16x128xf32>
    %cst_16 = arith.constant dense<0.000000e+00> : vector<128xf32>
    %25 = vector.multi_reduction <add>, %24, %cst_16 [0] : vector<16x128xf32> to vector<128xf32>
    %26 = vector.shape_cast %25 : vector<128xf32> to vector<1x128xf32>
    %27 = tpu.concatenate %23, %26 in 0 : vector<1x128xf32>, vector<1x128xf32> -> vector<2x128xf32>
    %c0_17 = arith.constant 0 : index
    %c0_18 = arith.constant 0 : index
    %c0_19 = arith.constant 0 : index
    %28 = vector.load %arg4[%c0_17, %c0_18, %c0_19] : memref<1x2x128xf32, #tpu.memory_space<vmem>>, vector<1x2x128xf32>
    %29 = vector.shape_cast %28 : vector<1x2x128xf32> to vector<2x128xf32>
    %30 = vector.shape_cast %27 : vector<2x128xf32> to vector<1x2x128xf32>
    tpu.vector_store %arg4[%c0_17, %c0_18, %c0_19], %30 {strides = array<i32>} : memref<1x2x128xf32, #tpu.memory_space<vmem>>, vector<1x2x128xf32>,
    return
  }
  func.func @transform_0(%arg0: i32) -> (i32, i32, i32) {
    %c0_i32 = arith.constant 0 : i32
    %c0_i32_0 = arith.constant 0 : i32
    %c0_i32_1 = arith.constant 0 : i32
    return %arg0, %c0_i32, %c0_i32_0 : i32, i32, i32
  }
  func.func @transform_1(%arg0: i32) -> (i32, i32, i32) {
    %c0_i32 = arith.constant 0 : i32
    %c0_i32_0 = arith.constant 0 : i32
    %c0_i32_1 = arith.constant 0 : i32
    %c0_i32_2 = arith.constant 0 : i32
    return %c0_i32, %c0_i32_0, %c0_i32_1 : i32, i32, i32
  }
  func.func @transform_2(%arg0: i32) -> (i32, i32, i32) {
    %c0_i32 = arith.constant 0 : i32
    %c0_i32_0 = arith.constant 0 : i32
    %c0_i32_1 = arith.constant 0 : i32
    return %arg0, %c0_i32, %c0_i32_0 : i32, i32, i32
  }
  func.func @transform_3(%arg0: i32) -> (i32, i32, i32) {
    %c0_i32 = arith.constant 0 : i32
    %c0_i32_0 = arith.constant 0 : i32
    %c0_i32_1 = arith.constant 0 : i32
    return %arg0, %c0_i32, %c0_i32_0 : i32, i32, i32
  }
}

</mosaic_0001>

<llo_original>
// kernel: tpu_custom_call.1
$region0: #{tpu_custom_call.1}
  #allocation0 [shape = 'u32[]', space=smem, size = 0x4, offset = 0x4, fixed_abs, tag = 'smem constant byte address 0x4 - core index']
  #allocation1 [shape = 'u32[144,128]{1,0:T(1,128)}', space=vmem, size = 0x12000, scoped, tag = 'internal scratch']
  %s0 = inlined_call_operand.vmem [shape: bf16[2,18,72], index: 0, kind: input, shape index: {}]
  %s1 = inlined_call_operand.hbm [shape: bf16[3,72,128], index: 1, kind: input, shape index: {}]
  %s2 = inlined_call_operand.hbm [shape: bf16[2,16,128], index: 2, kind: output, shape index: {0}]
  %s3 = inlined_call_operand.hbm [shape: f32[2,2,128], index: 3, kind: output, shape index: {1}]
  %4 = xla_tuple %s2, %s3
  %s5 = sld [smem:[#allocation0]]
  $region53: #{tpu_custom_call.1} parent=0
    _
  %s7 = ssub.s32 1, %s5
  %s8 = scalar_select 0, %s7, %s5
  $region1: #{tpu_custom_call.1} parent=0
    #allocation2 [shape = 'u8[55296]{0}', space=vmem, size = 0xd800, scoped, tag = 'input window, operand 1, single buffered']
    #allocation3 [shape = 's32[2]{0}', space=sflag, size = 0x8, scoped, tag = 'scoped memory for tpu_custom_call.1']
    #allocation4 [shape = 's32[2]{0}', space=sflag, size = 0x8, scoped, tag = 'scoped memory for tpu_custom_call.1']
    #allocation5 [shape = 'u8[8192]{0}', space=vmem, size = 0x2000, scoped, tag = 'output window, operand 0']
    #allocation6 [shape = 'u8[2048]{0}', space=vmem, size = 0x800, scoped, tag = 'output window, operand 1']
    #allocation7 [shape = 's32[2]{0}', space=sflag, size = 0x8, scoped, tag = 'scoped memory for tpu_custom_call.1']
    %9 = vsyncpa [#allocation3], 0
    %10 = vsyncpa [#allocation4], 0
    %s11 = scalar_lea.sflag [#allocation4], 1
    %12 = vsyncpa %s11, 0
    %13 = vsyncpa [#allocation7], 0
    %s14 = scalar_lea.sflag [#allocation7], 1
    %15 = vsyncpa %s14, 0
    loop: start=0, step=1, limit=4
    $region2: #{tpu_custom_call.1} parent=1 // loop_pre_header
      _
    $region3: #{tpu_custom_call.1} parent=1 // loop_header
      %s17 = sphi 0, %s21
      %p18 = scmp.ge.s32.totalorder %s17, 4
      %s27 = sphi 0, %s29
      %s30 = sphi 0, %s27
      %s31 = sphi 0, %s30
      %s47 = sphi 0, %s31
      %s51 = sphi 0, %s51
      %s53 = sphi 0, %s51
      %s54 = sphi 0, %s53
      %s68 = sphi 0, %s54
      %s74 = sphi 0, %s76
      %s77 = sphi 0, %s74
      %s78 = sphi 0, %s77
      %s94 = sphi 0, %s78
      %s100 = sphi 0, %s102
      %s103 = sphi 0, %s100
      %s104 = sphi 0, %s103
      %s120 = sphi 0, %s104
    $region4: #{tpu_custom_call.1} parent=1 // loop_header_branch
      %20 = sbr.rel (%p18) target = $region8
    $region5: #{tpu_custom_call.1} parent=1 // loop_body
      %s22 = ssub.s32 %s17, 1
      %s23 = ssub.s32 %s17, 2
      %s24 = sadd.s32 %s17, 1
      %s25 = ssub.s32 %s17, %s24
      %p26 = scmp.eq.s32.totalorder %s25, 0
      %s28 = sadd.s32 %s27, 1
      %s29 = scalar_select %p26, %s27, %s28
      %p32 = pneg %p26
      %p33 = scmp.eq.s32.totalorder %s17, 1
      %p34 = por %p32, %p33
      %p35 = scmp.ne.s32.totalorder %s27, %s30
      %p36 = scmp.eq.s32.totalorder %s17, 0
      %p37 = por %p35, %p36
      %p38 = scmp.ne.s32.totalorder %s27, %s30
      %p39 = scmp.eq.s32.totalorder %s22, 1
      %p40 = por %p38, %p39
      %p41 = scmp.ne.s32.totalorder %s30, %s31
      %p42 = scmp.eq.s32.totalorder %s22, 0
      %p43 = por %p41, %p42
      %p44 = scmp.ne.s32.totalorder %s30, %s31
      %p45 = scmp.eq.s32.totalorder %s23, 1
      %p46 = por %p44, %p45
      %p48 = scmp.ne.s32.totalorder %s31, %s47
      %p49 = scmp.eq.s32.totalorder %s23, 0
      %p50 = por %p48, %p49
      %s52 = sadd.s32 %s51, 1
      %p55 = scmp.eq.s32.totalorder %s17, 1
      %p56 = scmp.ne.s32.totalorder %s51, %s53
      %p57 = scmp.eq.s32.totalorder %s17, 0
      %p58 = por %p56, %p57
      %p59 = scmp.ne.s32.totalorder %s51, %s53
      %p60 = scmp.eq.s32.totalorder %s22, 1
      %p61 = por %p59, %p60
      %p62 = scmp.ne.s32.totalorder %s53, %s54
      %p63 = scmp.eq.s32.totalorder %s22, 0
      %p64 = por %p62, %p63
      %p65 = scmp.ne.s32.totalorder %s53, %s54
      %p66 = scmp.eq.s32.totalorder %s23, 1
      %p67 = por %p65, %p66
      %p69 = scmp.ne.s32.totalorder %s54, %s68
      %p70 = scmp.eq.s32.totalorder %s23, 0
      %p71 = por %p69, %p70
      %s72 = ssub.s32 %s17, %s24
      %p73 = scmp.eq.s32.totalorder %s72, 0
      %s75 = sadd.s32 %s74, 1
      %s76 = scalar_select %p73, %s74, %s75
      %p79 = pneg %p73
      %p80 = scmp.eq.s32.totalorder %s17, 1
      %p81 = por %p79, %p80
      %p82 = scmp.ne.s32.totalorder %s74, %s77
      %p83 = scmp.eq.s32.totalorder %s17, 0
      %p84 = por %p82, %p83
      %p85 = scmp.ne.s32.totalorder %s74, %s77
      %p86 = scmp.eq.s32.totalorder %s22, 1
      %p87 = por %p85, %p86
      %p88 = scmp.ne.s32.totalorder %s77, %s78
      %p89 = scmp.eq.s32.totalorder %s22, 0
      %p90 = por %p88, %p89
      %p91 = scmp.ne.s32.totalorder %s77, %s78
      %p92 = scmp.eq.s32.totalorder %s23, 1
      %p93 = por %p91, %p92
      %p95 = scmp.ne.s32.totalorder %s78, %s94
      %p96 = scmp.eq.s32.totalorder %s23, 0
      %p97 = por %p95, %p96
      %s98 = ssub.s32 %s17, %s24
      %p99 = scmp.eq.s32.totalorder %s98, 0
      %s101 = sadd.s32 %s100, 1
      %s102 = scalar_select %p99, %s100, %s101
      %p105 = pneg %p99
      %p106 = scmp.eq.s32.totalorder %s17, 1
      %p107 = por %p105, %p106
      %p108 = scmp.ne.s32.totalorder %s100, %s103
      %p109 = scmp.eq.s32.totalorder %s17, 0
      %p110 = por %p108, %p109
      %p111 = scmp.ne.s32.totalorder %s100, %s103
      %p112 = scmp.eq.s32.totalorder %s22, 1
      %p113 = por %p111, %p112
      %p114 = scmp.ne.s32.totalorder %s103, %s104
      %p115 = scmp.eq.s32.totalorder %s22, 0
      %p116 = por %p114, %p115
      %p117 = scmp.ne.s32.totalorder %s103, %s104
      %p118 = scmp.eq.s32.totalorder %s23, 1
      %p119 = por %p117, %p118
      %p121 = scmp.ne.s32.totalorder %s104, %s120
      %p122 = scmp.eq.s32.totalorder %s23, 0
      %p123 = por %p121, %p122
      %p124 = scmp.le.s32.totalorder 1, %s17
      %p125 = scmp.lt.s32.totalorder %s17, 3
      %p126 = pnand %p124, %p125
      %p127 = pneg %p126
      // Predicated region
      $region9: #{tpu_custom_call.1} parent=5 // pred_check
        _
      $region10: #{tpu_custom_call.1} parent=5 // pred_check_branch
        %129 = sbr.rel (%p126) target = $region12
      $region11: #{tpu_custom_call.1} parent=5 // pred_region
        %s130 = ssub.s32 %s17, 1
        // Predicated region
        $region13: #{tpu_custom_call.1} parent=11 // pred_check
          %p131 = pneg %p64
        $region14: #{tpu_custom_call.1} parent=11 // pred_check_branch
          %133 = sbr.rel (%p131) target = $region16
        $region15: #{tpu_custom_call.1} parent=11 // pred_region
          %s135 = ssub.s32 1728, 1728
          %136 = vsyncadd [#allocation3], %s135
          %s137 = sshll.u32 [#allocation2], 4
          %s138 = int_to_ptr.vmem [resolvable:$true] %s137
          %143 = dma.hbm_to_vmem [thread:$0]  %s1, 1728, %s138, [#allocation3], 64, 64, 4
        $region16: #{tpu_custom_call.1} parent=11 // pred_fallthru
          _
      $region12: #{tpu_custom_call.1} parent=5 // pred_fallthru
        _
      %p144 = scmp.lt.s32.totalorder %s17, 2
      // Predicated region
      $region17: #{tpu_custom_call.1} parent=5 // pred_check
        %p145 = pneg %p144
      $region18: #{tpu_custom_call.1} parent=5 // pred_check_branch
        %147 = sbr.rel (%p145) target = $region20
      $region19: #{tpu_custom_call.1} parent=5 // pred_region
        // Predicated region
        $region21: #{tpu_custom_call.1} parent=19 // pred_check
          %p148 = pneg %p37
        $region22: #{tpu_custom_call.1} parent=19 // pred_check_branch
          %150 = sbr.rel (%p148) target = $region24
        $region23: #{tpu_custom_call.1} parent=19 // pred_region
          %p151 = scmp.lt.s32.totalorder %s17, 1
          %s152 = scalar_select %p151, %s17, 1
          %s153 = smul.addr %s152, 3
          %s154 = smul.addr %s153, 4
          %s155 = scalar_lea.vmem %s0, %s154
        $region24: #{tpu_custom_call.1} parent=19 // pred_fallthru
          _
      $region20: #{tpu_custom_call.1} parent=5 // pred_fallthru
        _
      %p156 = scmp.le.s32.totalorder 1, %s17
      %p157 = scmp.lt.s32.totalorder %s17, 3
      %p158 = pnand %p156, %p157
      %p159 = pneg %p158
      // Predicated region
      $region25: #{tpu_custom_call.1} parent=5 // pred_check
        _
      $region26: #{tpu_custom_call.1} parent=5 // pred_check_branch
        %161 = sbr.rel (%p158) target = $region28
      $region27: #{tpu_custom_call.1} parent=5 // pred_region
        %s162 = ssub.s32 %s17, 1
        // Predicated region
        $region29: #{tpu_custom_call.1} parent=27 // pred_check
          %p163 = pneg %p64
        $region30: #{tpu_custom_call.1} parent=27 // pred_check_branch
          %165 = sbr.rel (%p163) target = $region32
        $region31: #{tpu_custom_call.1} parent=27 // pred_region
          %166 = dma.done [#allocation3], 1728
        $region32: #{tpu_custom_call.1} parent=27 // pred_fallthru
          _
        %p167 = scmp.lt.s32.totalorder %s22, 1
        %s168 = scalar_select %p167, %s22, 1
        %s169 = smul.addr %s168, 3
        %s170 = smul.addr %s169, 4
        %s171 = scalar_lea.vmem %s0, %s170
        %p172 = pneg %p43
        %p173 = pneg %p40
        %p174 = pneg %p64
        %p175 = pneg %p61
        %p176 = pneg %p90
        %p177 = pneg %p87
        %s178 = sand.u32 %s77, 1
        %s179 = scalar_lea.sflag [#allocation4], %s178
        %s180 = sand.u32 %s77, 1
        %s181 = smul.addr %s180, 8
        %s182 = scalar_lea.vmem [#allocation5], %s181
        %p183 = pneg %p116
        %p184 = pneg %p113
        %s185 = sand.u32 %s103, 1
        %s186 = scalar_lea.sflag [#allocation7], %s185
        %s187 = sand.u32 %s103, 1
        %s188 = smul.addr %s187, 2
        %s189 = scalar_lea.vmem [#allocation6], %s188
        %p190 = scmp.lt.s32.totalorder %s22, 1
        %s191 = scalar_select %p190, %s22, 1
        %s192 = smul.addr %s191, 3
        %s193 = smul.addr %s192, 4
        %s194 = scalar_lea.vmem %s0, %s193
        %v196 = vld [vmem:[%s194] sm:$0xf]
        %v197 = vld [vmem:[%s194 + $0x4] sm:$0xf]
        %v198 = vld [vmem:[%s194 + $0x8] sm:$0x1]
        %v199 = vld [vmem:[#allocation2] sm:$0xf]
        %v200 = vld [vmem:[#allocation2 + $0x4] sm:$0xf]
        %v201 = vld [vmem:[#allocation2 + $0x8] sm:$0xf]
        %v202 = vld [vmem:[#allocation2 + $0xc] sm:$0xf]
        %v203 = vld [vmem:[#allocation2 + $0x10] sm:$0xf]
        %v204 = vld [vmem:[#allocation2 + $0x14] sm:$0xf]
        %v205 = vld [vmem:[#allocation2 + $0x18] sm:$0xf]
        %v206 = vld [vmem:[#allocation2 + $0x1c] sm:$0xf]
        %v207 = vld [vmem:[#allocation2 + $0x20] sm:$0xf]
        %s208 = scalar_lea.vmem [#allocation2], 36
        %v209 = vld [vmem:[%s208] sm:$0xf]
        %v210 = vld [vmem:[%s208 + $0x4] sm:$0xf]
        %v211 = vld [vmem:[%s208 + $0x8] sm:$0xf]
        %v212 = vld [vmem:[%s208 + $0xc] sm:$0xf]
        %v213 = vld [vmem:[%s208 + $0x10] sm:$0xf]
        %v214 = vld [vmem:[%s208 + $0x14] sm:$0xf]
        %v215 = vld [vmem:[%s208 + $0x18] sm:$0xf]
        %v216 = vld [vmem:[%s208 + $0x1c] sm:$0xf]
        %v217 = vld [vmem:[%s208 + $0x20] sm:$0xf]
        %v221 = vunpack.c.l.b16 %v196
        %v222 = vunpack.c.l.b16 %v197
        %v223 = vunpack.c.l.b16 %v198
        %v224 = vpack.c.b16 %v222, %v221
        %v225 = vpack.c.b16 %v223, %v223
        %vm226 = vsmask.f32 7424
        %v228 = vshrl.u32 %v224, 16
        %v230 = vshll.u32 %v224, 16
        %v232 = vrot.slane %v230, 1
        %v233 = vor.u32 %v228, %v232
        %v235 = vshll.u32 %v225, 16
        %v237 = vrot.slane %v235, 1
        %v238 = vsel %vm226, %v233, %v237
        %v248 = vunpack.c.l.b16 %v209
        %v249 = vunpack.c.l.b16 %v210
        %v250 = vunpack.c.l.b16 %v211
        %v251 = vunpack.c.l.b16 %v212
        %v252 = vunpack.c.l.b16 %v213
        %v253 = vunpack.c.l.b16 %v214
        %v254 = vunpack.c.l.b16 %v215
        %v255 = vunpack.c.l.b16 %v216
        %v256 = vunpack.c.l.b16 %v217
        %v257 = vpack.c.b16 %v249, %v248
        %v258 = vpack.c.b16 %v251, %v250
        %v259 = vpack.c.b16 %v253, %v252
        %v260 = vpack.c.b16 %v255, %v254
        %v261 = vpack.c.b16 %v256, %v256
        %vm266 = vcmask 588800
        %v268 = vsel %vm266, %v238, 0
        %vm270 = vcmask 1043456
        %v272 = vsel %vm270, %v261, 0
        %274 = vmatprep.subr.bf16.mxu0 0
        %275 = vmatpush1.bf16.msra.mxu0 %v257
        %276 = vmatprep.subr.bf16.mxu0 0
        %277 = vmatpush1.bf16.msra.mxu0 %v258
        %278 = vmatprep.subr.bf16.mxu0 0
        %279 = vmatpush1.bf16.msra.mxu0 %v259
        %280 = vmatprep.subr.bf16.mxu0 0
        %281 = vmatpush1.bf16.msra.mxu0 %v260
        %282 = vmatprep.subr.bf16.mxu0 0
        %283 = vmatpush1.bf16.msra.mxu0 %v272
        %284 = vmatprep.subr.bf16.mxu0 0
        %285 = vmatpush1.bf16.msra.mxu0 0
        %286 = vmatprep.subr.bf16.mxu0 0
        %287 = vmatpush1.bf16.msra.mxu0 0
        %288 = vmatprep.subr.bf16.mxu0 0
        %289 = vmatpush1.bf16.msra.mxu0 0
        %290 = vmatprep.subr.bf16.mxu0 0
        %291 = vmatpush1.bf16.msra.mxu0 0
        %292 = vmatprep.subr.bf16.mxu0 0
        %293 = vmatpush1.bf16.msra.mxu0 0
        %294 = vmatprep.subr.bf16.mxu0 0
        %295 = vmatpush1.bf16.msra.mxu0 0
        %296 = vmatprep.subr.bf16.mxu0 0
        %297 = vmatpush1.bf16.msra.mxu0 0
        %298 = vmatprep.subr.bf16.mxu0 0
        %299 = vmatpush1.bf16.msra.mxu0 0
        %300 = vmatprep.subr.bf16.mxu0 0
        %301 = vmatpush1.bf16.msra.mxu0 0
        %302 = vmatprep.subr.bf16.mxu0 0
        %303 = vmatpush1.bf16.msra.mxu0 0
        %304 = vmatprep.subr.bf16.mxu0 0
        %305 = vmatpush1.bf16.msra.mxu0 0
        %306 = vmatprep.mubr.bf16.mxu0 0
        %307 = vmatmul.mubr.bf16.gmra.mrb[0].mxu0 %v268
        %v308 = vpop.f32.mrb[0].mxu0
        %v309 = vadd.f32 0.0, %v308
        %v310 = vpop.f32.mrb[0].mxu0
        %v311 = vpop.f32.mrb[0].mxu0
        %v312 = vadd.f32 0.0, %v311
        %v313 = vpop.f32.mrb[0].mxu0
        %314 = vdwg.mxu0
        %v324 = vunpack.c.l.b16 %v199
        %v325 = vunpack.c.l.b16 %v200
        %v326 = vunpack.c.l.b16 %v201
        %v327 = vunpack.c.l.b16 %v202
        %v328 = vunpack.c.l.b16 %v203
        %v329 = vunpack.c.l.b16 %v204
        %v330 = vunpack.c.l.b16 %v205
        %v331 = vunpack.c.l.b16 %v206
        %v332 = vunpack.c.l.b16 %v207
        %v333 = vpack.c.b16 %v325, %v324
        %v334 = vpack.c.b16 %v327, %v326
        %v335 = vpack.c.b16 %v329, %v328
        %v336 = vpack.c.b16 %v331, %v330
        %v337 = vpack.c.b16 %v332, %v332
        %v342 = vsel %vm266, %v224, 0
        %v345 = vsel %vm270, %v337, 0
        %347 = vmatprep.subr.bf16.mxu0 0
        %348 = vmatpush1.bf16.msra.mxu0 %v333
        %349 = vmatprep.subr.bf16.mxu0 0
        %350 = vmatpush1.bf16.msra.mxu0 %v334
        %351 = vmatprep.subr.bf16.mxu0 0
        %352 = vmatpush1.bf16.msra.mxu0 %v335
        %353 = vmatprep.subr.bf16.mxu0 0
        %354 = vmatpush1.bf16.msra.mxu0 %v336
        %355 = vmatprep.subr.bf16.mxu0 0
        %356 = vmatpush1.bf16.msra.mxu0 %v345
        %357 = vmatprep.subr.bf16.mxu0 0
        %358 = vmatpush1.bf16.msra.mxu0 0
        %359 = vmatprep.subr.bf16.mxu0 0
        %360 = vmatpush1.bf16.msra.mxu0 0
        %361 = vmatprep.subr.bf16.mxu0 0
        %362 = vmatpush1.bf16.msra.mxu0 0
        %363 = vmatprep.subr.bf16.mxu0 0
        %364 = vmatpush1.bf16.msra.mxu0 0
        %365 = vmatprep.subr.bf16.mxu0 0
        %366 = vmatpush1.bf16.msra.mxu0 0
        %367 = vmatprep.subr.bf16.mxu0 0
        %368 = vmatpush1.bf16.msra.mxu0 0
        %369 = vmatprep.subr.bf16.mxu0 0
        %370 = vmatpush1.bf16.msra.mxu0 0
        %371 = vmatprep.subr.bf16.mxu0 0
        %372 = vmatpush1.bf16.msra.mxu0 0
        %373 = vmatprep.subr.bf16.mxu0 0
        %374 = vmatpush1.bf16.msra.mxu0 0
        %375 = vmatprep.subr.bf16.mxu0 0
        %376 = vmatpush1.bf16.msra.mxu0 0
        %377 = vmatprep.subr.bf16.mxu0 0
        %378 = vmatpush1.bf16.msra.mxu0 0
        %379 = vmatprep.mubr.bf16.mxu0 0
        %380 = vmatmul.mubr.bf16.gmra.mrb[0].mxu0 %v342
        %v381 = vpop.f32.mrb[0].mxu0
        %v382 = vadd.f32 %v309, %v381
        %v383 = vpop.f32.mrb[0].mxu0
        %v384 = vpop.f32.mrb[0].mxu0
        %v385 = vadd.f32 %v312, %v384
        %v386 = vpop.f32.mrb[0].mxu0
        %387 = vdwg.mxu0
        %s388 = scalar_lea.vmem [#allocation2], 72
        %v389 = vld [vmem:[%s388] sm:$0xf]
        %v390 = vld [vmem:[%s388 + $0x4] sm:$0xf]
        %v391 = vld [vmem:[%s388 + $0x8] sm:$0xf]
        %v392 = vld [vmem:[%s388 + $0xc] sm:$0xf]
        %v393 = vld [vmem:[%s388 + $0x10] sm:$0xf]
        %v394 = vld [vmem:[%s388 + $0x14] sm:$0xf]
        %v395 = vld [vmem:[%s388 + $0x18] sm:$0xf]
        %v396 = vld [vmem:[%s388 + $0x1c] sm:$0xf]
        %v397 = vld [vmem:[%s388 + $0x20] sm:$0xf]
        %vm398 = vcmask 1046528
        %v399 = vrot.slane %v224, 1
        %v400 = vrot.slane %v225, 1
        %v401 = vsel %vm398, %v399, %v400
        %v411 = vunpack.c.l.b16 %v389
        %v412 = vunpack.c.l.b16 %v390
        %v413 = vunpack.c.l.b16 %v391
        %v414 = vunpack.c.l.b16 %v392
        %v415 = vunpack.c.l.b16 %v393
        %v416 = vunpack.c.l.b16 %v394
        %v417 = vunpack.c.l.b16 %v395
        %v418 = vunpack.c.l.b16 %v396
        %v419 = vunpack.c.l.b16 %v397
        %v420 = vpack.c.b16 %v412, %v411
        %v421 = vpack.c.b16 %v414, %v413
        %v422 = vpack.c.b16 %v416, %v415
        %v423 = vpack.c.b16 %v418, %v417
        %v424 = vpack.c.b16 %v419, %v419
        %v430 = vsel %vm266, %v401, 0
        %v433 = vsel %vm270, %v424, 0
        %435 = vmatprep.subr.bf16.mxu0 0
        %436 = vmatpush1.bf16.msra.mxu0 %v420
        %437 = vmatprep.subr.bf16.mxu0 0
        %438 = vmatpush1.bf16.msra.mxu0 %v421
        %439 = vmatprep.subr.bf16.mxu0 0
        %440 = vmatpush1.bf16.msra.mxu0 %v422
        %441 = vmatprep.subr.bf16.mxu0 0
        %442 = vmatpush1.bf16.msra.mxu0 %v423
        %443 = vmatprep.subr.bf16.mxu0 0
        %444 = vmatpush1.bf16.msra.mxu0 %v433
        %445 = vmatprep.subr.bf16.mxu0 0
        %446 = vmatpush1.bf16.msra.mxu0 0
        %447 = vmatprep.subr.bf16.mxu0 0
        %448 = vmatpush1.bf16.msra.mxu0 0
        %449 = vmatprep.subr.bf16.mxu0 0
        %450 = vmatpush1.bf16.msra.mxu0 0
        %451 = vmatprep.subr.bf16.mxu0 0
        %452 = vmatpush1.bf16.msra.mxu0 0
        %453 = vmatprep.subr.bf16.mxu0 0
        %454 = vmatpush1.bf16.msra.mxu0 0
        %455 = vmatprep.subr.bf16.mxu0 0
        %456 = vmatpush1.bf16.msra.mxu0 0
        %457 = vmatprep.subr.bf16.mxu0 0
        %458 = vmatpush1.bf16.msra.mxu0 0
        %459 = vmatprep.subr.bf16.mxu0 0
        %460 = vmatpush1.bf16.msra.mxu0 0
        %461 = vmatprep.subr.bf16.mxu0 0
        %462 = vmatpush1.bf16.msra.mxu0 0
        %463 = vmatprep.subr.bf16.mxu0 0
        %464 = vmatpush1.bf16.msra.mxu0 0
        %465 = vmatprep.subr.bf16.mxu0 0
        %466 = vmatpush1.bf16.msra.mxu0 0
        %467 = vmatprep.mubr.bf16.mxu0 0
        %468 = vmatmul.mubr.bf16.gmra.mrb[0].mxu0 %v430
        %v469 = vpop.f32.mrb[0].mxu0
        %v470 = vadd.f32 0.0, %v469
        %v471 = vpop.f32.mrb[0].mxu0
        %v472 = vpop.f32.mrb[0].mxu0
        %v473 = vadd.f32 0.0, %v472
        %v474 = vpop.f32.mrb[0].mxu0
        %475 = vdwg.mxu0
        %v476 = vadd.f32 %v382, %v470
        %v477 = vadd.f32 %v385, %v473
        %v478 = vpack.c.bf16 %v477, %v476
        %v480 = vunpack.c.l.b16 %v478
        %v481 = vunpack.c.h.b16 %v478
        %v482 = vpack.c.b16 %v480, %v480
        %v483 = vpack.c.b16 %v481, %v481
        %486 = vst [vmem:[%s182] sm:$0xf] %v482
        %487 = vst [vmem:[%s182 + $0x4] sm:$0xf] %v483
        %v488 = vadd.f32 %v476, %v477
        %v489 = vrot.slane %v488, 4
        %v490 = vadd.f32 %v488, %v489
        %v491 = vrot.slane %v490, 2
        %v492 = vadd.f32 %v490, %v491
        %v493 = vrot.slane %v492, 1
        %v494 = vadd.f32 %v492, %v493
        %v495 = vmul.f32 %v476, %v476
        %v496 = vmul.f32 %v477, %v477
        %v497 = vadd.f32 %v495, %v496
        %v498 = vrot.slane %v497, 4
        %v499 = vadd.f32 %v497, %v498
        %v500 = vrot.slane %v499, 2
        %v501 = vadd.f32 %v499, %v500
        %v502 = vrot.slane %v501, 1
        %v503 = vadd.f32 %v501, %v502
        %vm504 = vcmask 1040384
        %v505 = vsel %vm504, %v494, %v503
        %506 = vst [vmem:[%s189] sm:$0x3] %v505
        %s507 = sand.u32 %s77, 1
        %s508 = scalar_lea.sflag [#allocation4], %s507
        %s509 = sand.u32 %s77, 1
        %s510 = smul.addr %s509, 8
        %s511 = scalar_lea.vmem [#allocation5], %s510
        %s512 = sand.u32 %s103, 1
        %s513 = scalar_lea.sflag [#allocation7], %s512
        %s514 = sand.u32 %s103, 1
        %s515 = smul.addr %s514, 2
        %s516 = scalar_lea.vmem [#allocation6], %s515
        // Predicated region
        $region33: #{tpu_custom_call.1} parent=27 // pred_check
          %p517 = pneg %p87
        $region34: #{tpu_custom_call.1} parent=27 // pred_check_branch
          %519 = sbr.rel (%p517) target = $region36
        $region35: #{tpu_custom_call.1} parent=27 // pred_region
          %s521 = ssub.s32 128, 128
          %522 = vsyncadd %s508, %s521
          %s523 = smul.addr %s22, 2
          %s524 = smul.addr %s523, 64
          %s525 = scalar_lea.hbm %s2, %s524
          %s526 = sshll.u32 %s511, 4
          %s527 = int_to_ptr.vmem [resolvable:$true] %s526
          %532 = dma.vmem_to_hbm [thread:$0]  %s527, 128, %s525, %s508, 64, 64, 4
        $region36: #{tpu_custom_call.1} parent=27 // pred_fallthru
          _
        // Predicated region
        $region37: #{tpu_custom_call.1} parent=27 // pred_check
          %p533 = pneg %p113
        $region38: #{tpu_custom_call.1} parent=27 // pred_check_branch
          %535 = sbr.rel (%p533) target = $region40
        $region39: #{tpu_custom_call.1} parent=27 // pred_region
          %s537 = ssub.s32 32, 32
          %538 = vsyncadd %s513, %s537
          %s539 = smul.addr %s22, 32
          %s540 = scalar_lea.hbm %s3, %s539
          %s542 = sshll.u32 %s516, 4
          %s543 = int_to_ptr.vmem [resolvable:$true] %s542
          %545 = dma.vmem_to_hbm [thread:$0]  %s543, 32, %s540, %s513
        $region40: #{tpu_custom_call.1} parent=27 // pred_fallthru
          _
      $region28: #{tpu_custom_call.1} parent=5 // pred_fallthru
        _
      %p546 = scmp.le.s32.totalorder 2, %s17
      // Predicated region
      $region41: #{tpu_custom_call.1} parent=5 // pred_check
        %p547 = pneg %p546
      $region42: #{tpu_custom_call.1} parent=5 // pred_check_branch
        %549 = sbr.rel (%p547) target = $region44
      $region43: #{tpu_custom_call.1} parent=5 // pred_region
        %s550 = ssub.s32 %s17, 2
        // Predicated region
        $region45: #{tpu_custom_call.1} parent=43 // pred_check
          %p551 = pneg %p93
        $region46: #{tpu_custom_call.1} parent=43 // pred_check_branch
          %553 = sbr.rel (%p551) target = $region48
        $region47: #{tpu_custom_call.1} parent=43 // pred_region
          %s554 = sand.u32 %s78, 1
          %s555 = scalar_lea.sflag [#allocation4], %s554
          %s556 = sand.u32 %s78, 1
          %s557 = smul.addr %s556, 8
          %s558 = scalar_lea.vmem [#allocation5], %s557
          %559 = dma.done %s555, 128
        $region48: #{tpu_custom_call.1} parent=43 // pred_fallthru
          _
        // Predicated region
        $region49: #{tpu_custom_call.1} parent=43 // pred_check
          %p560 = pneg %p119
        $region50: #{tpu_custom_call.1} parent=43 // pred_check_branch
          %562 = sbr.rel (%p560) target = $region52
        $region51: #{tpu_custom_call.1} parent=43 // pred_region
          %s563 = sand.u32 %s104, 1
          %s564 = scalar_lea.sflag [#allocation7], %s563
          %s565 = sand.u32 %s104, 1
          %s566 = smul.addr %s565, 2
          %s567 = scalar_lea.vmem [#allocation6], %s566
          %568 = dma.done %s564, 32
        $region52: #{tpu_custom_call.1} parent=43 // pred_fallthru
          _
      $region44: #{tpu_custom_call.1} parent=5 // pred_fallthru
        _
    $region6: #{tpu_custom_call.1} parent=1 // loop_footer
      %s21 = sadd.s32 1, %s17
    $region7: #{tpu_custom_call.1} parent=1 // loop_footer_branch
      %16 = sbr.rel target = $region3
    $region8: #{tpu_custom_call.1} parent=1 // loop_exit
      _
    %569 = vsyncpa [#allocation3], 1
    %s570 = scalar_lea.sflag [#allocation3], 1
    %571 = vsyncpa %s570, 1
    %572 = vsyncpa [#allocation4], 1
    %s573 = scalar_lea.sflag [#allocation4], 1
    %574 = vsyncpa %s573, 1
    %575 = vsyncpa [#allocation7], 1
    %s576 = scalar_lea.sflag [#allocation7], 1
    %577 = vsyncpa %s576, 1

</llo_original>
